<compile_context>
chip_gen: v7x
topology: tpu7x:2x2x1
jax: 0.10.0
libtpu: 0.0.40
codegen_flags: <defaults>
</compile_context>

<pallas_src>
import functools

import jax
import jax.numpy as jnp
from jax import lax
from jax.experimental import pallas as pl
from jax.experimental.pallas import tpu as pltpu

NSPLIT = 2  # pass-1 reduction split (uses both TensorCores on v7x)


def _round_up(x, m):
    return ((x + m - 1) // m) * m


def _hidden_block(ef, sd, w1_ref, b1_ref, w2e_ref, w2sd_ref, b2_ref):
    """z = ReLU(concat([ReLU(ef @ W1 + b1), src, dst]) @ W2 + b2).

    The concat matmul is split into (eh @ W2e) + (concat(src,dst) @ W2sd) so no
    in-kernel concatenate/relayout is needed.  All MXU operands are bf16 with
    f32 accumulation; VPU elementwise math stays f32.
    """
    eh = jnp.dot(ef, w1_ref[...], preferred_element_type=jnp.float32)
    eh = jnp.maximum(eh + b1_ref[...], 0.0)
    z = jnp.dot(eh.astype(jnp.bfloat16), w2e_ref[...],
                preferred_element_type=jnp.float32)
    z = z + jnp.dot(sd, w2sd_ref[...], preferred_element_type=jnp.float32)
    return jnp.maximum(z + b2_ref[...], 0.0)


def _stats_kernel(ef_ref, sd_ref, w1_ref, b1_ref, w2e_ref, w2sd_ref, b2_ref,
                  sum_ref, sumsq_ref, *, tile_rows, tiles_per_split, num_rows):
    """Pass 1: accumulate sublane-group partial sum(z) / sum(z*z).

    Grid = (NSPLIT, tiles_per_split); each split owns one (8, 2H) partial-sum
    block, revisited along the inner 'arbitrary' axis.
    """
    c = pl.program_id(0)
    i = pl.program_id(1)

    @pl.when(i == 0)
    def _init():
        sum_ref[...] = jnp.zeros_like(sum_ref)
        sumsq_ref[...] = jnp.zeros_like(sumsq_ref)

    z = _hidden_block(ef_ref[...], sd_ref[...],
                      w1_ref, b1_ref, w2e_ref, w2sd_ref, b2_ref)

    tile_start = (c * tiles_per_split + i) * tile_rows

    def _accumulate(zz):
        # (TE, 2H) -> (TE//8, 8, 2H): reduce over vreg groups on the VPU;
        # the final 8-row + NSPLIT reduction happens in the wrapper.
        zg = zz.reshape(tile_rows // 8, 8, zz.shape[-1])
        sum_ref[...] += jnp.sum(zg, axis=0)
        sumsq_ref[...] += jnp.sum(zg * zg, axis=0)

    # Only pay for row masking on tiles that actually contain padded rows.
    @pl.when(tile_start + tile_rows > num_rows)
    def _masked_tail():
        row = tile_start + lax.broadcasted_iota(jnp.int32, z.shape, 0)
        _accumulate(jnp.where(row < num_rows, z, 0.0))

    @pl.when(tile_start + tile_rows <= num_rows)
    def _full_tile():
        _accumulate(z)


def _apply_kernel(ef_ref, sd_ref, w1_ref, b1_ref, w2e_ref, w2sd_ref, b2_ref,
                  w3_ref, b3_ref, out_ref, *, num_classes):
    """Pass 2: recompute z, BN-folded classifier head, masked LogSoftmax."""
    z = _hidden_block(ef_ref[...], sd_ref[...],
                      w1_ref, b1_ref, w2e_ref, w2sd_ref, b2_ref)

    # BatchNorm is already folded into w3_ref / b3_ref by the wrapper.
    logits = jnp.dot(z.astype(jnp.bfloat16), w3_ref[...],
                     preferred_element_type=jnp.float32)
    logits = jnp.maximum(logits + b3_ref[...], 0.0)

    # Padded class lanes must not contaminate the log-softmax.
    if num_classes < logits.shape[-1]:
        col = lax.broadcasted_iota(jnp.int32, logits.shape, 1)
        logits = jnp.where(col < num_classes, logits, -jnp.inf)

    m = jnp.max(logits, axis=1, keepdims=True)
    shifted = logits - m
    lse = jnp.log(jnp.sum(jnp.exp(shifted), axis=1, keepdims=True))
    out_ref[...] = (shifted - lse).astype(out_ref.dtype)


def _default_vmem_limit():
    # Generation aware: v5e/v6e have 128 MiB VMEM -> 64 MiB limit; v7x has
    # 64 MiB -> 32 MiB.  Conservative 32 MiB fallback if the query fails.
    try:
        phys = int(pltpu.get_tpu_info().vmem_capacity_bytes)
        return int(min(64 * 1024 * 1024, phys // 2))
    except Exception:
        return 32 * 1024 * 1024


def edge_predictor(edge_feats, src_h, dst_h, params, *, tile_rows=1024):
    """edge_feats: (E, Fe); src_h/dst_h: (E, Fn) gathered node features."""
    E, Fe = edge_feats.shape
    Fn = src_h.shape[1]
    H = params["w1"].shape[1]
    H2 = params["b2"].shape[-1]
    C = params["w3"].shape[1]
    eps = 1e-5

    f32 = jnp.float32
    bf16 = jnp.bfloat16

    # Lane-dense padded widths (multiples of 128).
    Hp = _round_up(H, 128)
    H2p = _round_up(H2, 128)
    Cp = _round_up(C, 128)

    # Row tiling over the edge dimension: TE must be a multiple of 16 for the
    # bf16 per-edge streams (sublane packing).
    TE = _round_up(min(tile_rows, _round_up(E, 16)), 16)
    ntiles = _round_up(E, TE) // TE
    tiles_per_split = pl.cdiv(ntiles, NSPLIT)
    Ep = NSPLIT * tiles_per_split * TE

    def pad2(a, rows, cols, dtype):
        a = a.astype(dtype)
        return jnp.pad(a, ((0, rows - a.shape[0]), (0, cols - a.shape[1])))

    # Weights / biases.  Zero padding is exact (padded rows/cols contribute 0).
    w1 = pad2(params["w1"], Fe, Hp, bf16)
    b1 = pad2(params["b1"], 1, Hp, f32)
    w2e = pad2(params["w2e"], Hp, H2p, bf16)
    w2sd = pad2(jnp.concatenate([params["w2s"], params["w2d"]], axis=0),
                2 * Fn, H2p, bf16)
    b2 = pad2(params["b2"], 1, H2p, f32)
    gamma = pad2(params["gamma"], 1, H2p, f32)
    beta = pad2(params["beta"], 1, H2p, f32)
    w3_f32 = pad2(params["w3"], H2p, Cp, f32)
    b3_f32 = pad2(params["b3"], 1, Cp, f32)

    # Per-edge streams: bf16, row-padded.  Padded rows are masked out of the BN
    # stats in pass 1 and their garbage pass-2 outputs are sliced off below.
    # TODO(synk): fuse the src/dst node-feature gather (n_feats[src_ids]) into
    # the kernel via a PrefetchScalarGridSpec row-gather instead of
    # materializing src_h / dst_h in HBM.
    ef_p = pad2(edge_feats, Ep, Fe, bf16)
    sd_p = pad2(jnp.concatenate([src_h, dst_h], axis=1), Ep, 2 * Fn, bf16)

    vmem_limit = _default_vmem_limit()

    # NOTE: on v7x with production widths the big constant-index weights could
    # additionally use pipeline_mode=pl.Buffered(1) to drop their unused second
    # buffer; irrelevant at these sizes so left at the default.
    const1 = lambda shape: pl.BlockSpec(shape, lambda c, i: (0, 0))
    row1 = lambda cols: pl.BlockSpec(
        (TE, cols), lambda c, i: (c * tiles_per_split + i, 0))
    const2 = lambda shape: pl.BlockSpec(shape, lambda i: (0, 0))
    row2 = lambda cols: pl.BlockSpec((TE, cols), lambda i: (i, 0))

    hidden_flops = 2 * Ep * (Fe * Hp + (Hp + 2 * Fn) * H2p)
    stream_bytes = (ef_p.size + sd_p.size) * 2
    weight_bytes1 = (w1.size + w2e.size + w2sd.size) * 2 + (b1.size + b2.size) * 4

    # ---- pass 1: BatchNorm batch statistics (partial sum, sum-of-squares) ----
    cost1 = pl.CostEstimate(
        flops=hidden_flops, transcendentals=0,
        bytes_accessed=stream_bytes + weight_bytes1 + 2 * NSPLIT * 8 * H2p * 4)

    part_sum, part_sumsq = pl.pallas_call(
        functools.partial(_stats_kernel, tile_rows=TE,
                          tiles_per_split=tiles_per_split, num_rows=E),
        grid=(NSPLIT, tiles_per_split),
        in_specs=[row1(Fe), row1(2 * Fn),
                  const1((Fe, Hp)), const1((1, Hp)),
                  const1((Hp, H2p)), const1((2 * Fn, H2p)), const1((1, H2p))],
        out_specs=(pl.BlockSpec((8, H2p), lambda c, i: (c, 0)),
                   pl.BlockSpec((8, H2p), lambda c, i: (c, 0))),
        out_shape=(jax.ShapeDtypeStruct((NSPLIT * 8, H2p), f32),
                   jax.ShapeDtypeStruct((NSPLIT * 8, H2p), f32)),
        compiler_params=pltpu.CompilerParams(
            dimension_semantics=("parallel", "arbitrary"),
            vmem_limit_bytes=vmem_limit),
        cost_estimate=cost1,
    )(ef_p, sd_p, w1, b1, w2e, w2sd, b2)

    # ---- fold BatchNorm (training-mode batch stats) into the head (exact) ----
    sums = jnp.sum(part_sum, axis=0)        # (H2p,)
    sumsqs = jnp.sum(part_sumsq, axis=0)    # (H2p,)
    mean = sums * (1.0 / E)
    var = jnp.maximum(sumsqs * (1.0 / E) - mean * mean, 0.0)
    scale = gamma[0] * lax.rsqrt(var + eps)                 # (H2p,)
    shift = beta[0] - mean * scale                          # (H2p,)
    w3f = (scale[:, None] * w3_f32).astype(bf16)            # (H2p, Cp)
    b3f = (shift @ w3_f32)[None, :] + b3_f32                # (1, Cp) f32

    # ---- pass 2: recompute z, folded head, masked log-softmax ----
    cost2 = pl.CostEstimate(
        flops=hidden_flops + 2 * Ep * H2p * Cp,
        transcendentals=Ep * (Cp + 1),
        bytes_accessed=stream_bytes + weight_bytes1
        + w3f.size * 2 + b3f.size * 4 + Ep * Cp * 2)

    out_p = pl.pallas_call(
        functools.partial(_apply_kernel, num_classes=C),
        grid=(Ep // TE,),
        in_specs=[row2(Fe), row2(2 * Fn),
                  const2((Fe, Hp)), const2((1, Hp)),
                  const2((Hp, H2p)), const2((2 * Fn, H2p)), const2((1, H2p)),
                  const2((H2p, Cp)), const2((1, Cp))],
        out_specs=pl.BlockSpec((TE, Cp), lambda i: (i, 0)),
        out_shape=jax.ShapeDtypeStruct((Ep, Cp), bf16),
        compiler_params=pltpu.CompilerParams(
            dimension_semantics=("parallel",),   # rows independent -> megacore
            vmem_limit_bytes=vmem_limit),
        cost_estimate=cost2,
    )(ef_p, sd_p, w1, b1, w2e, w2sd, b2, w3f, b3f)

    # Slice off row/class padding; return f32 for the consumer (the HBM write
    # itself was bf16).
    return out_p[:E, :C].astype(f32)


def init_params(key, edge_feature_size, node_feature_size, hidden_size, num_classes):
    """Deterministic synthetic parameters (shapes match the nn.Module)."""
    ks = jax.random.split(key, 6)
    h2 = 2 * hidden_size
    in2 = hidden_size + 2 * node_feature_size   # concat width of predictor[0]
    w2 = jax.random.normal(ks[2], (in2, h2), jnp.float32) * 0.05
    return {
        "w1": jax.random.normal(ks[0], (edge_feature_size, hidden_size), jnp.float32) * 0.1,
        "b1": jax.random.normal(ks[1], (1, hidden_size), jnp.float32) * 0.01,
        "w2e": w2[:hidden_size],
        "w2s": w2[hidden_size:hidden_size + node_feature_size],
        "w2d": w2[hidden_size + node_feature_size:],
        "b2": jax.random.normal(ks[3], (1, h2), jnp.float32) * 0.01,
        "gamma": jnp.ones((1, h2), jnp.float32),   # BatchNorm1d default init
        "beta": jnp.zeros((1, h2), jnp.float32),
        "w3": jax.random.normal(ks[4], (h2, num_classes), jnp.float32) * 0.1,
        "b3": jax.random.normal(ks[5], (1, num_classes), jnp.float32) * 0.01,
    }


def edge_predictor_reference(edge_feats, src_h, dst_h, params):
    """Pure-JAX f32 reference of the PyTorch forward (training-mode BN)."""
    eh = jnp.maximum(edge_feats @ params["w1"] + params["b1"], 0.0)
    h = jnp.concatenate([eh, src_h, dst_h], axis=1)
    w2 = jnp.concatenate([params["w2e"], params["w2s"], params["w2d"]], axis=0)
    z = jnp.maximum(h @ w2 + params["b2"], 0.0)
    mean = jnp.mean(z, axis=0, keepdims=True)
    var = jnp.mean((z - mean) ** 2, axis=0, keepdims=True)
    zn = (z - mean) * lax.rsqrt(var + 1e-5) * params["gamma"] + params["beta"]
    logits = jnp.maximum(zn @ params["w3"] + params["b3"], 0.0)
    return jax.nn.log_softmax(logits, axis=1)


if __name__ == "__main__":
    # Small, deterministic problem: 20 edges over 6 nodes.
    edge_feature_size = 16
    node_feature_size = 8
    hidden_size = 32
    num_classes = 4
    num_nodes = 6
    num_edges = 20

    key = jax.random.PRNGKey(0)
    k_ef, k_nf, k_src, k_dst, k_par = jax.random.split(key, 5)

    edge_feats = jax.random.normal(k_ef, (num_edges, edge_feature_size), jnp.float32)
    n_feats = jax.random.normal(k_nf, (num_nodes, node_feature_size), jnp.float32)
    src_ids = jax.random.randint(k_src, (num_edges,), 0, num_nodes)
    dst_ids = jax.random.randint(k_dst, (num_edges,), 0, num_nodes)

    # Graph glue (DGL block.apply_edges gather) in plain JAX:
    # edges.src['hn'] / edges.dst['hn'] == n_feats[src_ids] / n_feats[dst_ids]
    src_h = n_feats[src_ids]
    dst_h = n_feats[dst_ids]

    params = init_params(k_par, edge_feature_size, node_feature_size,
                         hidden_size, num_classes)

    # tile_rows=16 forces a multi-tile grid (two tiles, one per pass-1 split)
    # and exercises the padded-row masking; the production default is 1024.
    scores = edge_predictor(edge_feats, src_h, dst_h, params, tile_rows=16)
    scores = jax.block_until_ready(scores)

    assert scores.shape == (num_edges, num_classes)
    assert bool(jnp.all(jnp.isfinite(scores)))
    # log-softmax rows must (log-)sum to ~1 (output is stored as bf16 in HBM).
    assert jnp.allclose(jnp.sum(jnp.exp(scores), axis=1), 1.0, atol=3e-2)

    ref = edge_predictor_reference(edge_feats, src_h, dst_h, params)
    # Loose tolerance: bf16 input streams + bf16 MXU operands (f32 accumulation)
    # + bf16 output store.
    assert jnp.allclose(scores, ref, atol=0.1), float(jnp.max(jnp.abs(scores - ref)))
    print("KERNEL_OK")
</pallas_src>

<mosaic_0001>
module attributes {stable_mosaic.version = 11 : i64} {
  func.func @_stats_kernel(%arg0: i32, %arg1: i32, %arg2: memref<16x16xbf16, #tpu.memory_space<vmem>>, %arg3: memref<16x16xbf16, #tpu.memory_space<vmem>>, %arg4: memref<16x128xbf16, #tpu.memory_space<vmem>>, %arg5: memref<1x128xf32, #tpu.memory_space<vmem>>, %arg6: memref<128x128xbf16, #tpu.memory_space<vmem>>, %arg7: memref<16x128xbf16, #tpu.memory_space<vmem>>, %arg8: memref<1x128xf32, #tpu.memory_space<vmem>>, %arg9: memref<8x128xf32, #tpu.memory_space<vmem>>, %arg10: memref<8x128xf32, #tpu.memory_space<vmem>>) attributes {dimension_semantics = [#tpu.dimension_semantics<parallel>, #tpu.dimension_semantics<arbitrary>], iteration_bounds = array<i64: 2, 1>, scalar_prefetch = 0 : i64, scratch_operands = 0 : i64, tpu.core_type = #tpu.core_type<tc>, window_params = [{transform_indices = @transform_0, window_bounds = array<i64: 16, 16>}, {transform_indices = @transform_1, window_bounds = array<i64: 16, 16>}, {pipeline_mode = #tpu.pipeline_mode<synchronous>, transform_indices = @transform_2, window_bounds = array<i64: 16, 128>}, {pipeline_mode = #tpu.pipeline_mode<synchronous>, transform_indices = @transform_3, window_bounds = array<i64: 1, 128>}, {pipeline_mode = #tpu.pipeline_mode<synchronous>, transform_indices = @transform_4, window_bounds = array<i64: 128, 128>}, {pipeline_mode = #tpu.pipeline_mode<synchronous>, transform_indices = @transform_5, window_bounds = array<i64: 16, 128>}, {pipeline_mode = #tpu.pipeline_mode<synchronous>, transform_indices = @transform_6, window_bounds = array<i64: 1, 128>}, {transform_indices = @transform_7, window_bounds = array<i64: 8, 128>}, {transform_indices = @transform_8, window_bounds = array<i64: 8, 128>}]} {
    %c0_i32 = arith.constant 0 : i32
    %0 = arith.cmpi eq, %arg1, %c0_i32 : i32
    %1 = arith.extui %0 : i1 to i32
    %c0_i32_0 = arith.constant 0 : i32
    %2 = arith.cmpi ne, %1, %c0_i32_0 : i32
    scf.if %2 {
      %cst_23 = arith.constant 0.000000e+00 : f32
      %34 = vector.broadcast %cst_23 : f32 to vector<8x128xf32>
      %c0_24 = arith.constant 0 : index
      %c0_25 = arith.constant 0 : index
      %35 = vector.load %arg9[%c0_24, %c0_25] : memref<8x128xf32, #tpu.memory_space<vmem>>, vector<8x128xf32>
      tpu.vector_store %arg9[%c0_24, %c0_25], %34 {strides = array<i32>} : memref<8x128xf32, #tpu.memory_space<vmem>>, vector<8x128xf32>,
      %cst_26 = arith.constant 0.000000e+00 : f32
      %36 = vector.broadcast %cst_26 : f32 to vector<8x128xf32>
      %c0_27 = arith.constant 0 : index
      %c0_28 = arith.constant 0 : index
      %37 = vector.load %arg10[%c0_27, %c0_28] : memref<8x128xf32, #tpu.memory_space<vmem>>, vector<8x128xf32>
      tpu.vector_store %arg10[%c0_27, %c0_28], %36 {strides = array<i32>} : memref<8x128xf32, #tpu.memory_space<vmem>>, vector<8x128xf32>,
    } else {
    }
    %c0 = arith.constant 0 : index
    %c0_1 = arith.constant 0 : index
    %3 = vector.load %arg2[%c0, %c0_1] : memref<16x16xbf16, #tpu.memory_space<vmem>>, vector<16x16xbf16>
    %c0_2 = arith.constant 0 : index
    %c0_3 = arith.constant 0 : index
    %4 = vector.load %arg3[%c0_2, %c0_3] : memref<16x16xbf16, #tpu.memory_space<vmem>>, vector<16x16xbf16>
    %c0_4 = arith.constant 0 : index
    %c0_5 = arith.constant 0 : index
    %5 = vector.load %arg4[%c0_4, %c0_5] : memref<16x128xbf16, #tpu.memory_space<vmem>>, vector<16x128xbf16>
    %cst = arith.constant dense<0.000000e+00> : vector<16x128xf32>
    %6 = tpu.matmul %3, %5, %cst {dimension_numbers = #tpu.dot_dimension_numbers<[1], [0], [0], [1], [0, 0, 1, 1], [], []>} : vector<16x16xbf16>, vector<16x128xbf16>, vector<16x128xf32> -> vector<16x128xf32>
    %c0_6 = arith.constant 0 : index
    %c0_7 = arith.constant 0 : index
    %7 = vector.load %arg5[%c0_6, %c0_7] : memref<1x128xf32, #tpu.memory_space<vmem>>, vector<1x128xf32>
    %8 = vector.broadcast %7 : vector<1x128xf32> to vector<16x128xf32>
    %9 = arith.addf %6, %8 : vector<16x128xf32>
    %cst_8 = arith.constant 0.000000e+00 : f32
    %10 = vector.broadcast %cst_8 : f32 to vector<16x128xf32>
    %11 = arith.maximumf %9, %10 : vector<16x128xf32>
    %12 = arith.truncf %11 : vector<16x128xf32> to vector<16x128xbf16>
    %c0_9 = arith.constant 0 : index
    %c0_10 = arith.constant 0 : index
    %13 = vector.load %arg6[%c0_9, %c0_10] : memref<128x128xbf16, #tpu.memory_space<vmem>>, vector<128x128xbf16>
    %cst_11 = arith.constant dense<0.000000e+00> : vector<16x128xf32>
    %14 = tpu.matmul %12, %13, %cst_11 {dimension_numbers = #tpu.dot_dimension_numbers<[1], [0], [0], [1], [0, 0, 1, 1], [], []>} : vector<16x128xbf16>, vector<128x128xbf16>, vector<16x128xf32> -> vector<16x128xf32>
    %c0_12 = arith.constant 0 : index
    %c0_13 = arith.constant 0 : index
    %15 = vector.load %arg7[%c0_12, %c0_13] : memref<16x128xbf16, #tpu.memory_space<vmem>>, vector<16x128xbf16>
    %cst_14 = arith.constant dense<0.000000e+00> : vector<16x128xf32>
    %16 = tpu.matmul %4, %15, %cst_14 {dimension_numbers = #tpu.dot_dimension_numbers<[1], [0], [0], [1], [0, 0, 1, 1], [], []>} : vector<16x16xbf16>, vector<16x128xbf16>, vector<16x128xf32> -> vector<16x128xf32>
    %17 = arith.addf %14, %16 : vector<16x128xf32>
    %c0_15 = arith.constant 0 : index
    %c0_16 = arith.constant 0 : index
    %18 = vector.load %arg8[%c0_15, %c0_16] : memref<1x128xf32, #tpu.memory_space<vmem>>, vector<1x128xf32>
    %19 = vector.broadcast %18 : vector<1x128xf32> to vector<16x128xf32>
    %20 = arith.addf %17, %19 : vector<16x128xf32>
    %cst_17 = arith.constant 0.000000e+00 : f32
    %21 = vector.broadcast %cst_17 : f32 to vector<16x128xf32>
    %22 = arith.maximumf %20, %21 : vector<16x128xf32>
    %c1_i32 = arith.constant 1 : i32
    %23 = arith.muli %arg0, %c1_i32 : i32
    %24 = arith.addi %23, %arg1 : i32
    %c16_i32 = arith.constant 16 : i32
    %25 = arith.muli %24, %c16_i32 : i32
    %c16_i32_18 = arith.constant 16 : i32
    %26 = arith.addi %25, %c16_i32_18 : i32
    %c20_i32 = arith.constant 20 : i32
    %27 = arith.cmpi sgt, %26, %c20_i32 : i32
    %28 = arith.extui %27 : i1 to i32
    %c0_i32_19 = arith.constant 0 : i32
    %29 = arith.cmpi ne, %28, %c0_i32_19 : i32
    scf.if %29 {
      %34 = tpu.iota {dimensions = array<i32: 0>} : vector<16x128xi32>
      %35 = vector.broadcast %25 : i32 to vector<16x128xi32>
      %36 = arith.addi %35, %34 : vector<16x128xi32>
      %c20_i32_23 = arith.constant 20 : i32
      %37 = vector.broadcast %c20_i32_23 : i32 to vector<16x128xi32>
      %38 = arith.cmpi slt, %36, %37 : vector<16x128xi32>
      %cst_24 = arith.constant 0.000000e+00 : f32
      %39 = vector.broadcast %cst_24 : f32 to vector<16x128xf32>
      %40 = arith.select %38, %22, %39 : vector<16x128xi1>, vector<16x128xf32>
      %41 = vector.shape_cast %40 : vector<16x128xf32> to vector<2x8x128xf32>
      %c0_25 = arith.constant 0 : index
      %c0_26 = arith.constant 0 : index
      %42 = vector.load %arg9[%c0_25, %c0_26] : memref<8x128xf32, #tpu.memory_space<vmem>>, vector<8x128xf32>
      %cst_27 = arith.constant dense<0.000000e+00> : vector<8x128xf32>
      %43 = vector.multi_reduction <add>, %41, %cst_27 [0] : vector<2x8x128xf32> to vector<8x128xf32>
      %44 = arith.addf %42, %43 : vector<8x128xf32>
      %c0_28 = arith.constant 0 : index
      %c0_29 = arith.constant 0 : index
      %45 = vector.load %arg9[%c0_28, %c0_29] : memref<8x128xf32, #tpu.memory_space<vmem>>, vector<8x128xf32>
      tpu.vector_store %arg9[%c0_28, %c0_29], %44 {strides = array<i32>} : memref<8x128xf32, #tpu.memory_space<vmem>>, vector<8x128xf32>,
      %c0_30 = arith.constant 0 : index
      %c0_31 = arith.constant 0 : index
      %46 = vector.load %arg10[%c0_30, %c0_31] : memref<8x128xf32, #tpu.memory_space<vmem>>, vector<8x128xf32>
      %47 = arith.mulf %41, %41 : vector<2x8x128xf32>
      %cst_32 = arith.constant dense<0.000000e+00> : vector<8x128xf32>
      %48 = vector.multi_reduction <add>, %47, %cst_32 [0] : vector<2x8x128xf32> to vector<8x128xf32>
      %49 = arith.addf %46, %48 : vector<8x128xf32>
      %c0_33 = arith.constant 0 : index
      %c0_34 = arith.constant 0 : index
      %50 = vector.load %arg10[%c0_33, %c0_34] : memref<8x128xf32, #tpu.memory_space<vmem>>, vector<8x128xf32>
      tpu.vector_store %arg10[%c0_33, %c0_34], %49 {strides = array<i32>} : memref<8x128xf32, #tpu.memory_space<vmem>>, vector<8x128xf32>,
    } else {
    }
    %c16_i32_20 = arith.constant 16 : i32
    %30 = arith.addi %25, %c16_i32_20 : i32
    %c20_i32_21 = arith.constant 20 : i32
    %31 = arith.cmpi sle, %30, %c20_i32_21 : i32
    %32 = arith.extui %31 : i1 to i32
    %c0_i32_22 = arith.constant 0 : i32
    %33 = arith.cmpi ne, %32, %c0_i32_22 : i32
    scf.if %33 {
      %34 = vector.shape_cast %22 : vector<16x128xf32> to vector<2x8x128xf32>
      %c0_23 = arith.constant 0 : index
      %c0_24 = arith.constant 0 : index
      %35 = vector.load %arg9[%c0_23, %c0_24] : memref<8x128xf32, #tpu.memory_space<vmem>>, vector<8x128xf32>
      %cst_25 = arith.constant dense<0.000000e+00> : vector<8x128xf32>
      %36 = vector.multi_reduction <add>, %34, %cst_25 [0] : vector<2x8x128xf32> to vector<8x128xf32>
      %37 = arith.addf %35, %36 : vector<8x128xf32>
      %c0_26 = arith.constant 0 : index
      %c0_27 = arith.constant 0 : index
      %38 = vector.load %arg9[%c0_26, %c0_27] : memref<8x128xf32, #tpu.memory_space<vmem>>, vector<8x128xf32>
      tpu.vector_store %arg9[%c0_26, %c0_27], %37 {strides = array<i32>} : memref<8x128xf32, #tpu.memory_space<vmem>>, vector<8x128xf32>,
      %c0_28 = arith.constant 0 : index
      %c0_29 = arith.constant 0 : index
      %39 = vector.load %arg10[%c0_28, %c0_29] : memref<8x128xf32, #tpu.memory_space<vmem>>, vector<8x128xf32>
      %40 = arith.mulf %34, %34 : vector<2x8x128xf32>
      %cst_30 = arith.constant dense<0.000000e+00> : vector<8x128xf32>
      %41 = vector.multi_reduction <add>, %40, %cst_30 [0] : vector<2x8x128xf32> to vector<8x128xf32>
      %42 = arith.addf %39, %41 : vector<8x128xf32>
      %c0_31 = arith.constant 0 : index
      %c0_32 = arith.constant 0 : index
      %43 = vector.load %arg10[%c0_31, %c0_32] : memref<8x128xf32, #tpu.memory_space<vmem>>, vector<8x128xf32>
      tpu.vector_store %arg10[%c0_31, %c0_32], %42 {strides = array<i32>} : memref<8x128xf32, #tpu.memory_space<vmem>>, vector<8x128xf32>,
    } else {
    }
    return
  }
  func.func @transform_0(%arg0: i32, %arg1: i32) -> (i32, i32) {
    %c1_i32 = arith.constant 1 : i32
    %0 = arith.muli %arg0, %c1_i32 : i32
    %1 = arith.addi %0, %arg1 : i32
    %c0_i32 = arith.constant 0 : i32
    %c0_i32_0 = arith.constant 0 : i32
    return %1, %c0_i32 : i32, i32
  }
  func.func @transform_1(%arg0: i32, %arg1: i32) -> (i32, i32) {
    %c1_i32 = arith.constant 1 : i32
    %0 = arith.muli %arg0, %c1_i32 : i32
    %1 = arith.addi %0, %arg1 : i32
    %c0_i32 = arith.constant 0 : i32
    %c0_i32_0 = arith.constant 0 : i32
    return %1, %c0_i32 : i32, i32
  }
  func.func @transform_2(%arg0: i32, %arg1: i32) -> (i32, i32) {
    %c0_i32 = arith.constant 0 : i32
    %c0_i32_0 = arith.constant 0 : i32
    %c0_i32_1 = arith.constant 0 : i32
    return %c0_i32, %c0_i32_0 : i32, i32
  }
  func.func @transform_3(%arg0: i32, %arg1: i32) -> (i32, i32) {
    %c0_i32 = arith.constant 0 : i32
    %c0_i32_0 = arith.constant 0 : i32
    %c0_i32_1 = arith.constant 0 : i32
    return %c0_i32, %c0_i32_0 : i32, i32
  }
  func.func @transform_4(%arg0: i32, %arg1: i32) -> (i32, i32) {
    %c0_i32 = arith.constant 0 : i32
    %c0_i32_0 = arith.constant 0 : i32
    %c0_i32_1 = arith.constant 0 : i32
    return %c0_i32, %c0_i32_0 : i32, i32
  }
  func.func @transform_5(%arg0: i32, %arg1: i32) -> (i32, i32) {
    %c0_i32 = arith.constant 0 : i32
    %c0_i32_0 = arith.constant 0 : i32
    %c0_i32_1 = arith.constant 0 : i32
    return %c0_i32, %c0_i32_0 : i32, i32
  }
  func.func @transform_6(%arg0: i32, %arg1: i32) -> (i32, i32) {
    %c0_i32 = arith.constant 0 : i32
    %c0_i32_0 = arith.constant 0 : i32
    %c0_i32_1 = arith.constant 0 : i32
    return %c0_i32, %c0_i32_0 : i32, i32
  }
  func.func @transform_7(%arg0: i32, %arg1: i32) -> (i32, i32) {
    %c0_i32 = arith.constant 0 : i32
    %c0_i32_0 = arith.constant 0 : i32
    return %arg0, %c0_i32 : i32, i32
  }
  func.func @transform_8(%arg0: i32, %arg1: i32) -> (i32, i32) {
    %c0_i32 = arith.constant 0 : i32
    %c0_i32_0 = arith.constant 0 : i32
    return %arg0, %c0_i32 : i32, i32
  }
}

</mosaic_0001>

<llo_original>
// kernel: tpu_custom_call.1
$region0: #{tpu_custom_call.1}
  #allocation0 [shape = 'u32[]', space=smem, size = 0x4, offset = 0x4, fixed_abs, tag = 'smem constant byte address 0x4 - core index']
  #allocation1 [shape = 'u32[144,128]{1,0:T(1,128)}', space=vmem, size = 0x12000, scoped, tag = 'internal scratch']
  %s0 = inlined_call_operand.vmem [shape: bf16[32,16], index: 0, kind: input, shape index: {}]
  %s1 = inlined_call_operand.vmem [shape: bf16[32,16], index: 1, kind: input, shape index: {}]
  %s2 = inlined_call_operand.vmem [shape: bf16[16,128], index: 2, kind: input, shape index: {}]
  %s3 = inlined_call_operand.vmem [shape: f32[1,128], index: 3, kind: input, shape index: {}]
  %s4 = inlined_call_operand.hbm [shape: bf16[128,128], index: 4, kind: input, shape index: {}]
  %s5 = inlined_call_operand.vmem [shape: bf16[16,128], index: 5, kind: input, shape index: {}]
  %s6 = inlined_call_operand.vmem [shape: f32[1,128], index: 6, kind: input, shape index: {}]
  %s7 = inlined_call_operand.hbm [shape: f32[16,128], index: 7, kind: output, shape index: {0}]
  %s8 = inlined_call_operand.hbm [shape: f32[16,128], index: 8, kind: output, shape index: {1}]
  %9 = xla_tuple %s7, %s8
  %s10 = sld [smem:[#allocation0]]
  $region85: #{tpu_custom_call.1} parent=0
    _
  %s12 = ssub.s32 1, %s10
  %s13 = scalar_select 0, %s12, %s10
  $region1: #{tpu_custom_call.1} parent=0
    #allocation2 [shape = 'u8[32768]{0}', space=vmem, size = 0x8000, scoped, tag = 'input window, operand 4, single buffered']
    #allocation3 [shape = 's32[2]{0}', space=sflag, size = 0x8, scoped, tag = 'scoped memory for tpu_custom_call.1']
    #allocation4 [shape = 's32[2]{0}', space=sflag, size = 0x8, scoped, tag = 'scoped memory for tpu_custom_call.1']
    #allocation5 [shape = 'u8[8192]{0}', space=vmem, size = 0x2000, scoped, tag = 'output window, operand 0']
    #allocation6 [shape = 'u8[8192]{0}', space=vmem, size = 0x2000, scoped, tag = 'output window, operand 1']
    #allocation7 [shape = 's32[2]{0}', space=sflag, size = 0x8, scoped, tag = 'scoped memory for tpu_custom_call.1']
    %14 = vsyncpa [#allocation3], 0
    %15 = vsyncpa [#allocation4], 0
    %s16 = scalar_lea.sflag [#allocation4], 1
    %17 = vsyncpa %s16, 0
    %18 = vsyncpa [#allocation7], 0
    %s19 = scalar_lea.sflag [#allocation7], 1
    %20 = vsyncpa %s19, 0
    loop: start=0, step=1, limit=4
    $region2: #{tpu_custom_call.1} parent=1 // loop_pre_header
      _
    $region3: #{tpu_custom_call.1} parent=1 // loop_header
      %s22 = sphi 0, %s26
      %p23 = scmp.ge.s32.totalorder %s22, 4
      %s29 = sphi 0, %s41
      %s30 = sphi 0, %s37
      %s31 = sphi 0, %s29
      %s32 = sphi 0, %s30
      %s33 = sphi 0, %s31
      %s34 = sphi 0, %s32
      %s46 = sphi 0, %s48
      %s49 = sphi 0, %s46
      %s50 = sphi 0, %s49
      %s66 = sphi 0, %s50
      %s74 = sphi 0, %s76
      %s77 = sphi 0, %s74
      %s78 = sphi 0, %s77
      %s94 = sphi 0, %s78
      %s98 = sphi 0, %s98
      %s100 = sphi 0, %s98
      %s101 = sphi 0, %s100
      %s115 = sphi 0, %s101
      %s119 = sphi 0, %s119
      %s121 = sphi 0, %s119
      %s122 = sphi 0, %s121
      %s136 = sphi 0, %s122
      %s140 = sphi 0, %s140
      %s142 = sphi 0, %s140
      %s143 = sphi 0, %s142
      %s157 = sphi 0, %s143
      %s161 = sphi 0, %s161
      %s163 = sphi 0, %s161
      %s164 = sphi 0, %s163
      %s178 = sphi 0, %s164
      %s182 = sphi 0, %s182
      %s184 = sphi 0, %s182
      %s185 = sphi 0, %s184
      %s199 = sphi 0, %s185
      %s205 = sphi 0, %s207
      %s208 = sphi 0, %s205
      %s209 = sphi 0, %s208
      %s225 = sphi 0, %s209
      %s231 = sphi 0, %s233
      %s234 = sphi 0, %s231
      %s235 = sphi 0, %s234
      %s251 = sphi 0, %s235
    $region4: #{tpu_custom_call.1} parent=1 // loop_header_branch
      %25 = sbr.rel (%p23) target = $region8
    $region5: #{tpu_custom_call.1} parent=1 // loop_body
      %s27 = ssub.s32 %s22, 1
      %s28 = ssub.s32 %s22, 2
      %s35 = sadd.s32 1, %s30
      %p36 = scmp.ge.s32.totalorder %s35, 1
      %s37 = scalar_select %p36, 0, %s35
      %s38 = sadd.s32 1, %s29
      %s39 = scalar_select %p36, %s38, %s29
      %p40 = scmp.ge.s32.totalorder %s39, 2
      %s41 = scalar_select %p40, 0, %s39
      %s42 = sadd.s32 %s29, %s30
      %s43 = sadd.s32 %s41, %s37
      %s44 = ssub.s32 %s42, %s43
      %p45 = scmp.eq.s32.totalorder %s44, 0
      %s47 = sadd.s32 %s46, 1
      %s48 = scalar_select %p45, %s46, %s47
      %p51 = pneg %p45
      %p52 = scmp.eq.s32.totalorder %s22, 1
      %p53 = por %p51, %p52
      %p54 = scmp.ne.s32.totalorder %s46, %s49
      %p55 = scmp.eq.s32.totalorder %s22, 0
      %p56 = por %p54, %p55
      %p57 = scmp.ne.s32.totalorder %s46, %s49
      %p58 = scmp.eq.s32.totalorder %s27, 1
      %p59 = por %p57, %p58
      %p60 = scmp.ne.s32.totalorder %s49, %s50
      %p61 = scmp.eq.s32.totalorder %s27, 0
      %p62 = por %p60, %p61
      %p63 = scmp.ne.s32.totalorder %s49, %s50
      %p64 = scmp.eq.s32.totalorder %s28, 1
      %p65 = por %p63, %p64
      %p67 = scmp.ne.s32.totalorder %s50, %s66
      %p68 = scmp.eq.s32.totalorder %s28, 0
      %p69 = por %p67, %p68
      %s70 = sadd.s32 %s29, %s30
      %s71 = sadd.s32 %s41, %s37
      %s72 = ssub.s32 %s70, %s71
      %p73 = scmp.eq.s32.totalorder %s72, 0
      %s75 = sadd.s32 %s74, 1
      %s76 = scalar_select %p73, %s74, %s75
      %p79 = pneg %p73
      %p80 = scmp.eq.s32.totalorder %s22, 1
      %p81 = por %p79, %p80
      %p82 = scmp.ne.s32.totalorder %s74, %s77
      %p83 = scmp.eq.s32.totalorder %s22, 0
      %p84 = por %p82, %p83
      %p85 = scmp.ne.s32.totalorder %s74, %s77
      %p86 = scmp.eq.s32.totalorder %s27, 1
      %p87 = por %p85, %p86
      %p88 = scmp.ne.s32.totalorder %s77, %s78
      %p89 = scmp.eq.s32.totalorder %s27, 0
      %p90 = por %p88, %p89
      %p91 = scmp.ne.s32.totalorder %s77, %s78
      %p92 = scmp.eq.s32.totalorder %s28, 1
      %p93 = por %p91, %p92
      %p95 = scmp.ne.s32.totalorder %s78, %s94
      %p96 = scmp.eq.s32.totalorder %s28, 0
      %p97 = por %p95, %p96
      %s99 = sadd.s32 %s98, 1
      %p102 = scmp.eq.s32.totalorder %s22, 1
      %p103 = scmp.ne.s32.totalorder %s98, %s100
      %p104 = scmp.eq.s32.totalorder %s22, 0
      %p105 = por %p103, %p104
      %p106 = scmp.ne.s32.totalorder %s98, %s100
      %p107 = scmp.eq.s32.totalorder %s27, 1
      %p108 = por %p106, %p107
      %p109 = scmp.ne.s32.totalorder %s100, %s101
      %p110 = scmp.eq.s32.totalorder %s27, 0
      %p111 = por %p109, %p110
      %p112 = scmp.ne.s32.totalorder %s100, %s101
      %p113 = scmp.eq.s32.totalorder %s28, 1
      %p114 = por %p112, %p113
      %p116 = scmp.ne.s32.totalorder %s101, %s115
      %p117 = scmp.eq.s32.totalorder %s28, 0
      %p118 = por %p116, %p117
      %s120 = sadd.s32 %s119, 1
      %p123 = scmp.eq.s32.totalorder %s22, 1
      %p124 = scmp.ne.s32.totalorder %s119, %s121
      %p125 = scmp.eq.s32.totalorder %s22, 0
      %p126 = por %p124, %p125
      %p127 = scmp.ne.s32.totalorder %s119, %s121
      %p128 = scmp.eq.s32.totalorder %s27, 1
      %p129 = por %p127, %p128
      %p130 = scmp.ne.s32.totalorder %s121, %s122
      %p131 = scmp.eq.s32.totalorder %s27, 0
      %p132 = por %p130, %p131
      %p133 = scmp.ne.s32.totalorder %s121, %s122
      %p134 = scmp.eq.s32.totalorder %s28, 1
      %p135 = por %p133, %p134
      %p137 = scmp.ne.s32.totalorder %s122, %s136
      %p138 = scmp.eq.s32.totalorder %s28, 0
      %p139 = por %p137, %p138
      %s141 = sadd.s32 %s140, 1
      %p144 = scmp.eq.s32.totalorder %s22, 1
      %p145 = scmp.ne.s32.totalorder %s140, %s142
      %p146 = scmp.eq.s32.totalorder %s22, 0
      %p147 = por %p145, %p146
      %p148 = scmp.ne.s32.totalorder %s140, %s142
      %p149 = scmp.eq.s32.totalorder %s27, 1
      %p150 = por %p148, %p149
      %p151 = scmp.ne.s32.totalorder %s142, %s143
      %p152 = scmp.eq.s32.totalorder %s27, 0
      %p153 = por %p151, %p152
      %p154 = scmp.ne.s32.totalorder %s142, %s143
      %p155 = scmp.eq.s32.totalorder %s28, 1
      %p156 = por %p154, %p155
      %p158 = scmp.ne.s32.totalorder %s143, %s157
      %p159 = scmp.eq.s32.totalorder %s28, 0
      %p160 = por %p158, %p159
      %s162 = sadd.s32 %s161, 1
      %p165 = scmp.eq.s32.totalorder %s22, 1
      %p166 = scmp.ne.s32.totalorder %s161, %s163
      %p167 = scmp.eq.s32.totalorder %s22, 0
      %p168 = por %p166, %p167
      %p169 = scmp.ne.s32.totalorder %s161, %s163
      %p170 = scmp.eq.s32.totalorder %s27, 1
      %p171 = por %p169, %p170
      %p172 = scmp.ne.s32.totalorder %s163, %s164
      %p173 = scmp.eq.s32.totalorder %s27, 0
      %p174 = por %p172, %p173
      %p175 = scmp.ne.s32.totalorder %s163, %s164
      %p176 = scmp.eq.s32.totalorder %s28, 1
      %p177 = por %p175, %p176
      %p179 = scmp.ne.s32.totalorder %s164, %s178
      %p180 = scmp.eq.s32.totalorder %s28, 0
      %p181 = por %p179, %p180
      %s183 = sadd.s32 %s182, 1
      %p186 = scmp.eq.s32.totalorder %s22, 1
      %p187 = scmp.ne.s32.totalorder %s182, %s184
      %p188 = scmp.eq.s32.totalorder %s22, 0
      %p189 = por %p187, %p188
      %p190 = scmp.ne.s32.totalorder %s182, %s184
      %p191 = scmp.eq.s32.totalorder %s27, 1
      %p192 = por %p190, %p191
      %p193 = scmp.ne.s32.totalorder %s184, %s185
      %p194 = scmp.eq.s32.totalorder %s27, 0
      %p195 = por %p193, %p194
      %p196 = scmp.ne.s32.totalorder %s184, %s185
      %p197 = scmp.eq.s32.totalorder %s28, 1
      %p198 = por %p196, %p197
      %p200 = scmp.ne.s32.totalorder %s185, %s199
      %p201 = scmp.eq.s32.totalorder %s28, 0
      %p202 = por %p200, %p201
      %s203 = ssub.s32 %s29, %s41
      %p204 = scmp.eq.s32.totalorder %s203, 0
      %s206 = sadd.s32 %s205, 1
      %s207 = scalar_select %p204, %s205, %s206
      %p210 = pneg %p204
      %p211 = scmp.eq.s32.totalorder %s22, 1
      %p212 = por %p210, %p211
      %p213 = scmp.ne.s32.totalorder %s205, %s208
      %p214 = scmp.eq.s32.totalorder %s22, 0
      %p215 = por %p213, %p214
      %p216 = scmp.ne.s32.totalorder %s205, %s208
      %p217 = scmp.eq.s32.totalorder %s27, 1
      %p218 = por %p216, %p217
      %p219 = scmp.ne.s32.totalorder %s208, %s209
      %p220 = scmp.eq.s32.totalorder %s27, 0
      %p221 = por %p219, %p220
      %p222 = scmp.ne.s32.totalorder %s208, %s209
      %p223 = scmp.eq.s32.totalorder %s28, 1
      %p224 = por %p222, %p223
      %p226 = scmp.ne.s32.totalorder %s209, %s225
      %p227 = scmp.eq.s32.totalorder %s28, 0
      %p228 = por %p226, %p227
      %s229 = ssub.s32 %s29, %s41
      %p230 = scmp.eq.s32.totalorder %s229, 0
      %s232 = sadd.s32 %s231, 1
      %s233 = scalar_select %p230, %s231, %s232
      %p236 = pneg %p230
      %p237 = scmp.eq.s32.totalorder %s22, 1
      %p238 = por %p236, %p237
      %p239 = scmp.ne.s32.totalorder %s231, %s234
      %p240 = scmp.eq.s32.totalorder %s22, 0
      %p241 = por %p239, %p240
      %p242 = scmp.ne.s32.totalorder %s231, %s234
      %p243 = scmp.eq.s32.totalorder %s27, 1
      %p244 = por %p242, %p243
      %p245 = scmp.ne.s32.totalorder %s234, %s235
      %p246 = scmp.eq.s32.totalorder %s27, 0
      %p247 = por %p245, %p246
      %p248 = scmp.ne.s32.totalorder %s234, %s235
      %p249 = scmp.eq.s32.totalorder %s28, 1
      %p250 = por %p248, %p249
      %p252 = scmp.ne.s32.totalorder %s235, %s251
      %p253 = scmp.eq.s32.totalorder %s28, 0
      %p254 = por %p252, %p253
      %p255 = scmp.le.s32.totalorder 1, %s22
      %p256 = scmp.lt.s32.totalorder %s22, 3
      %p257 = pnand %p255, %p256
      %p258 = pneg %p257
      // Predicated region
      $region9: #{tpu_custom_call.1} parent=5 // pred_check
        _
      $region10: #{tpu_custom_call.1} parent=5 // pred_check_branch
        %260 = sbr.rel (%p257) target = $region12
      $region11: #{tpu_custom_call.1} parent=5 // pred_region
        %s261 = ssub.s32 %s22, 1
        // Predicated region
        $region13: #{tpu_custom_call.1} parent=11 // pred_check
          %p262 = pneg %p111
        $region14: #{tpu_custom_call.1} parent=11 // pred_check_branch
          %264 = sbr.rel (%p262) target = $region16
        $region15: #{tpu_custom_call.1} parent=11 // pred_region
          _
        $region16: #{tpu_custom_call.1} parent=11 // pred_fallthru
          _
        // Predicated region
        $region17: #{tpu_custom_call.1} parent=11 // pred_check
          %p265 = pneg %p132
        $region18: #{tpu_custom_call.1} parent=11 // pred_check_branch
          %267 = sbr.rel (%p265) target = $region20
        $region19: #{tpu_custom_call.1} parent=11 // pred_region
          _
        $region20: #{tpu_custom_call.1} parent=11 // pred_fallthru
          _
        // Predicated region
        $region21: #{tpu_custom_call.1} parent=11 // pred_check
          %p268 = pneg %p153
        $region22: #{tpu_custom_call.1} parent=11 // pred_check_branch
          %270 = sbr.rel (%p268) target = $region24
        $region23: #{tpu_custom_call.1} parent=11 // pred_region
          %s272 = ssub.s32 1024, 1024
          %273 = vsyncadd [#allocation3], %s272
          %s274 = sshll.u32 [#allocation2], 4
          %s275 = int_to_ptr.vmem [resolvable:$true] %s274
          %280 = dma.hbm_to_vmem [thread:$0]  %s4, 1024, %s275, [#allocation3], 64, 64, 4
        $region24: #{tpu_custom_call.1} parent=11 // pred_fallthru
          _
        // Predicated region
        $region25: #{tpu_custom_call.1} parent=11 // pred_check
          %p281 = pneg %p174
        $region26: #{tpu_custom_call.1} parent=11 // pred_check_branch
          %283 = sbr.rel (%p281) target = $region28
        $region27: #{tpu_custom_call.1} parent=11 // pred_region
          _
        $region28: #{tpu_custom_call.1} parent=11 // pred_fallthru
          _
        // Predicated region
        $region29: #{tpu_custom_call.1} parent=11 // pred_check
          %p284 = pneg %p195
        $region30: #{tpu_custom_call.1} parent=11 // pred_check_branch
          %286 = sbr.rel (%p284) target = $region32
        $region31: #{tpu_custom_call.1} parent=11 // pred_region
          _
        $region32: #{tpu_custom_call.1} parent=11 // pred_fallthru
          _
      $region12: #{tpu_custom_call.1} parent=5 // pred_fallthru
        _
      %p287 = scmp.lt.s32.totalorder %s22, 2
      // Predicated region
      $region33: #{tpu_custom_call.1} parent=5 // pred_check
        %p288 = pneg %p287
      $region34: #{tpu_custom_call.1} parent=5 // pred_check_branch
        %290 = sbr.rel (%p288) target = $region36
      $region35: #{tpu_custom_call.1} parent=5 // pred_region
        // Predicated region
        $region37: #{tpu_custom_call.1} parent=35 // pred_check
          %p291 = pneg %p56
        $region38: #{tpu_custom_call.1} parent=35 // pred_check_branch
          %293 = sbr.rel (%p291) target = $region40
        $region39: #{tpu_custom_call.1} parent=35 // pred_region
          %s294 = sadd.s32 %s29, %s30
          %s295 = smul.u32 2, %s294
          %p296 = scmp.lt.s32.totalorder %s295, 3
          %s297 = scalar_select %p296, %s295, 3
          %s298 = smul.addr %s297, 4
          %s299 = scalar_lea.vmem %s0, %s298
          %s300 = sadd.s32 %s29, %s30
          %s301 = smul.u32 2, %s300
        $region40: #{tpu_custom_call.1} parent=35 // pred_fallthru
          _
        // Predicated region
        $region41: #{tpu_custom_call.1} parent=35 // pred_check
          %p302 = pneg %p84
        $region42: #{tpu_custom_call.1} parent=35 // pred_check_branch
          %304 = sbr.rel (%p302) target = $region44
        $region43: #{tpu_custom_call.1} parent=35 // pred_region
          %s305 = sadd.s32 %s29, %s30
          %s306 = smul.u32 2, %s305
          %p307 = scmp.lt.s32.totalorder %s306, 3
          %s308 = scalar_select %p307, %s306, 3
          %s309 = smul.addr %s308, 4
          %s310 = scalar_lea.vmem %s1, %s309
          %s311 = sadd.s32 %s29, %s30
          %s312 = smul.u32 2, %s311
        $region44: #{tpu_custom_call.1} parent=35 // pred_fallthru
          _
      $region36: #{tpu_custom_call.1} parent=5 // pred_fallthru
        _
      %p313 = scmp.le.s32.totalorder 1, %s22
      %p314 = scmp.lt.s32.totalorder %s22, 3
      %p315 = pnand %p313, %p314
      %p316 = pneg %p315
      // Predicated region
      $region45: #{tpu_custom_call.1} parent=5 // pred_check
        _
      $region46: #{tpu_custom_call.1} parent=5 // pred_check_branch
        %318 = sbr.rel (%p315) target = $region48
      $region47: #{tpu_custom_call.1} parent=5 // pred_region
        %s319 = ssub.s32 %s22, 1
        // Predicated region
        $region49: #{tpu_custom_call.1} parent=47 // pred_check
          %p320 = pneg %p153
        $region50: #{tpu_custom_call.1} parent=47 // pred_check_branch
          %322 = sbr.rel (%p320) target = $region52
        $region51: #{tpu_custom_call.1} parent=47 // pred_region
          %323 = dma.done [#allocation3], 1024
        $region52: #{tpu_custom_call.1} parent=47 // pred_fallthru
          _
        %s324 = sadd.s32 %s31, %s32
        %s325 = smul.u32 2, %s324
        %p326 = scmp.lt.s32.totalorder %s325, 3
        %s327 = scalar_select %p326, %s325, 3
        %s328 = smul.addr %s327, 4
        %s329 = scalar_lea.vmem %s0, %s328
        %p330 = pneg %p62
        %p331 = pneg %p59
        %s332 = sadd.s32 %s31, %s32
        %s333 = smul.u32 2, %s332
        %p334 = scmp.lt.s32.totalorder %s333, 3
        %s335 = scalar_select %p334, %s333, 3
        %s336 = smul.addr %s335, 4
        %s337 = scalar_lea.vmem %s1, %s336
        %p338 = pneg %p90
        %p339 = pneg %p87
        %p340 = pneg %p111
        %p341 = pneg %p108
        %p342 = pneg %p132
        %p343 = pneg %p129
        %p344 = pneg %p153
        %p345 = pneg %p150
        %p346 = pneg %p174
        %p347 = pneg %p171
        %p348 = pneg %p195
        %p349 = pneg %p192
        %p350 = pneg %p221
        %p351 = pneg %p218
        %s352 = sand.u32 %s208, 1
        %s353 = scalar_lea.sflag [#allocation4], %s352
        %s354 = sand.u32 %s208, 1
        %s355 = smul.addr %s354, 8
        %s356 = scalar_lea.vmem [#allocation5], %s355
        %p357 = pneg %p247
        %p358 = pneg %p244
        %s359 = sand.u32 %s234, 1
        %s360 = scalar_lea.sflag [#allocation7], %s359
        %s361 = sand.u32 %s234, 1
        %s362 = smul.addr %s361, 8
        %s363 = scalar_lea.vmem [#allocation6], %s362
        %s364 = sadd.s32 %s31, %s32
        %s365 = smul.u32 2, %s364
        %p366 = scmp.lt.s32.totalorder %s365, 3
        %s367 = scalar_select %p366, %s365, 3
        %s368 = smul.addr %s367, 4
        %s369 = scalar_lea.vmem %s0, %s368
        %s370 = sadd.s32 %s31, %s32
        %s371 = smul.u32 2, %s370
        %s372 = sadd.s32 %s31, %s32
        %s373 = smul.u32 2, %s372
        %p374 = scmp.lt.s32.totalorder %s373, 3
        %s375 = scalar_select %p374, %s373, 3
        %s376 = smul.addr %s375, 4
        %s377 = scalar_lea.vmem %s1, %s376
        %s378 = sadd.s32 %s31, %s32
        %s379 = smul.u32 2, %s378
        %p381 = scmp.eq.s32.totalorder %s32, 0
        // Predicated region
        $region53: #{tpu_custom_call.1} parent=47 // pred_check
          %p382 = pneg %p381
        $region54: #{tpu_custom_call.1} parent=47 // pred_check_branch
          %384 = sbr.rel (%p382) target = $region56
        $region55: #{tpu_custom_call.1} parent=47 // pred_region
          %385 = vst [vmem:[%s356] sm:$0xff] 0.0
          %386 = vst [vmem:[%s363] sm:$0xff] 0.0
        $region56: #{tpu_custom_call.1} parent=47 // pred_fallthru
          _
        %v387 = vld [vmem:[%s369] sm:$0xf]
        %v388 = vld [vmem:[%s369 + $0x4] sm:$0xf]
        %v389 = vld [vmem:[%s377] sm:$0xf]
        %v390 = vld [vmem:[%s377 + $0x4] sm:$0xf]
        %v391 = vld [vmem:[%s2] sm:$0xf]
        %v392 = vld [vmem:[%s2 + $0x4] sm:$0xf]
        %v393 = vld [vmem:[%s3] sm:$0x1]
        %v395 = vlaneseq
        %v396 = vshrl.u32 %v395, 7
        %v397 = vsub.s32 0, %v396
        %v398 = vrot.slane %v393, %v397
        %v402 = vunpack.c.l.b16 %v387
        %v403 = vunpack.c.l.b16 %v388
        %v404 = vpack.c.b16 %v403, %v402
        %v407 = vunpack.c.l.b16 %v391
        %v408 = vunpack.c.l.b16 %v392
        %v409 = vpack.c.b16 %v408, %v407
        %vm411 = vcmask 130048
        %v413 = vsel %vm411, %v404, 0
        %415 = vmatprep.subr.bf16.mxu0 0
        %416 = vmatpush1.bf16.msra.mxu0 %v409
        %417 = vmatprep.subr.bf16.mxu0 0
        %418 = vmatpush1.bf16.msra.mxu0 0
        %419 = vmatprep.subr.bf16.mxu0 0
        %420 = vmatpush1.bf16.msra.mxu0 0
        %421 = vmatprep.subr.bf16.mxu0 0
        %422 = vmatpush1.bf16.msra.mxu0 0
        %423 = vmatprep.subr.bf16.mxu0 0
        %424 = vmatpush1.bf16.msra.mxu0 0
        %425 = vmatprep.subr.bf16.mxu0 0
        %426 = vmatpush1.bf16.msra.mxu0 0
        %427 = vmatprep.subr.bf16.mxu0 0
        %428 = vmatpush1.bf16.msra.mxu0 0
        %429 = vmatprep.subr.bf16.mxu0 0
        %430 = vmatpush1.bf16.msra.mxu0 0
        %431 = vmatprep.subr.bf16.mxu0 0
        %432 = vmatpush1.bf16.msra.mxu0 0
        %433 = vmatprep.subr.bf16.mxu0 0
        %434 = vmatpush1.bf16.msra.mxu0 0
        %435 = vmatprep.subr.bf16.mxu0 0
        %436 = vmatpush1.bf16.msra.mxu0 0
        %437 = vmatprep.subr.bf16.mxu0 0
        %438 = vmatpush1.bf16.msra.mxu0 0
        %439 = vmatprep.subr.bf16.mxu0 0
        %440 = vmatpush1.bf16.msra.mxu0 0
        %441 = vmatprep.subr.bf16.mxu0 0
        %442 = vmatpush1.bf16.msra.mxu0 0
        %443 = vmatprep.subr.bf16.mxu0 0
        %444 = vmatpush1.bf16.msra.mxu0 0
        %445 = vmatprep.subr.bf16.mxu0 0
        %446 = vmatpush1.bf16.msra.mxu0 0
        %447 = vmatprep.mubr.bf16.mxu0 0
        %448 = vmatmul.mubr.bf16.gmra.mrb[0].mxu0 %v413
        %v449 = vpop.f32.mrb[0].mxu0
        %v450 = vadd.f32 %v398, %v449
        %v451 = vpop.f32.mrb[0].mxu0
        %v452 = vpop.f32.mrb[0].mxu0
        %v453 = vadd.f32 %v398, %v452
        %v454 = vpop.f32.mrb[0].mxu0
        %455 = vdwg.mxu0
        %v456 = vmax.f32 %v450, 0.0
        %v457 = vmax.f32 %v453, 0.0
        %v458 = vpack.c.bf16 %v457, %v456
        %v459 = vld [vmem:[#allocation2] sm:$0xf]
        %v460 = vld [vmem:[#allocation2 + $0x4] sm:$0xf]
        %v461 = vld [vmem:[#allocation2 + $0x8] sm:$0xf]
        %v462 = vld [vmem:[#allocation2 + $0xc] sm:$0xf]
        %v463 = vld [vmem:[#allocation2 + $0x10] sm:$0xf]
        %v464 = vld [vmem:[#allocation2 + $0x14] sm:$0xf]
        %v465 = vld [vmem:[#allocation2 + $0x18] sm:$0xf]
        %v466 = vld [vmem:[#allocation2 + $0x1c] sm:$0xf]
        %v467 = vld [vmem:[#allocation2 + $0x20] sm:$0xf]
        %v468 = vld [vmem:[#allocation2 + $0x24] sm:$0xf]
        %v469 = vld [vmem:[#allocation2 + $0x28] sm:$0xf]
        %v470 = vld [vmem:[#allocation2 + $0x2c] sm:$0xf]
        %v471 = vld [vmem:[#allocation2 + $0x30] sm:$0xf]
        %v472 = vld [vmem:[#allocation2 + $0x34] sm:$0xf]
        %v473 = vld [vmem:[#allocation2 + $0x38] sm:$0xf]
        %v474 = vld [vmem:[#allocation2 + $0x3c] sm:$0xf]
        %v475 = vld [vmem:[%s5] sm:$0xf]
        %v476 = vld [vmem:[%s5 + $0x4] sm:$0xf]
        %v479 = vunpack.c.l.b16 %v389
        %v480 = vunpack.c.l.b16 %v390
        %v481 = vpack.c.b16 %v480, %v479
        %v484 = vunpack.c.l.b16 %v475
        %v485 = vunpack.c.l.b16 %v476
        %v486 = vpack.c.b16 %v485, %v484
        %v489 = vsel %vm411, %v481, 0
        %491 = vmatprep.subr.bf16.mxu0 0
        %492 = vmatpush1.bf16.msra.mxu0 %v486
        %493 = vmatprep.subr.bf16.mxu0 0
        %494 = vmatpush1.bf16.msra.mxu0 0
        %495 = vmatprep.subr.bf16.mxu0 0
        %496 = vmatpush1.bf16.msra.mxu0 0
        %497 = vmatprep.subr.bf16.mxu0 0
        %498 = vmatpush1.bf16.msra.mxu0 0
        %499 = vmatprep.subr.bf16.mxu0 0
        %500 = vmatpush1.bf16.msra.mxu0 0
        %501 = vmatprep.subr.bf16.mxu0 0
        %502 = vmatpush1.bf16.msra.mxu0 0
        %503 = vmatprep.subr.bf16.mxu0 0
        %504 = vmatpush1.bf16.msra.mxu0 0
        %505 = vmatprep.subr.bf16.mxu0 0
        %506 = vmatpush1.bf16.msra.mxu0 0
        %507 = vmatprep.subr.bf16.mxu0 0
        %508 = vmatpush1.bf16.msra.mxu0 0
        %509 = vmatprep.subr.bf16.mxu0 0
        %510 = vmatpush1.bf16.msra.mxu0 0
        %511 = vmatprep.subr.bf16.mxu0 0
        %512 = vmatpush1.bf16.msra.mxu0 0
        %513 = vmatprep.subr.bf16.mxu0 0
        %514 = vmatpush1.bf16.msra.mxu0 0
        %515 = vmatprep.subr.bf16.mxu0 0
        %516 = vmatpush1.bf16.msra.mxu0 0
        %517 = vmatprep.subr.bf16.mxu0 0
        %518 = vmatpush1.bf16.msra.mxu0 0
        %519 = vmatprep.subr.bf16.mxu0 0
        %520 = vmatpush1.bf16.msra.mxu0 0
        %521 = vmatprep.subr.bf16.mxu0 0
        %522 = vmatpush1.bf16.msra.mxu0 0
        %523 = vmatprep.mubr.bf16.mxu0 0
        %524 = vmatmul.mubr.bf16.gmra.mrb[0].mxu0 %v489
        %v525 = vpop.f32.mrb[0].mxu0
        %v526 = vadd.f32 0.0, %v525
        %v527 = vpop.f32.mrb[0].mxu0
        %v528 = vpop.f32.mrb[0].mxu0
        %v529 = vadd.f32 0.0, %v528
        %v530 = vpop.f32.mrb[0].mxu0
        %531 = vdwg.mxu0
        %v548 = vunpack.c.l.b16 %v459
        %v549 = vunpack.c.l.b16 %v460
        %v550 = vunpack.c.l.b16 %v461
        %v551 = vunpack.c.l.b16 %v462
        %v552 = vunpack.c.l.b16 %v463
        %v553 = vunpack.c.l.b16 %v464
        %v554 = vunpack.c.l.b16 %v465
        %v555 = vunpack.c.l.b16 %v466
        %v556 = vunpack.c.l.b16 %v467
        %v557 = vunpack.c.l.b16 %v468
        %v558 = vunpack.c.l.b16 %v469
        %v559 = vunpack.c.l.b16 %v470
        %v560 = vunpack.c.l.b16 %v471
        %v561 = vunpack.c.l.b16 %v472
        %v562 = vunpack.c.l.b16 %v473
        %v563 = vunpack.c.l.b16 %v474
        %v564 = vpack.c.b16 %v549, %v548
        %v565 = vpack.c.b16 %v551, %v550
        %v566 = vpack.c.b16 %v553, %v552
        %v567 = vpack.c.b16 %v555, %v554
        %v568 = vpack.c.b16 %v557, %v556
        %v569 = vpack.c.b16 %v559, %v558
        %v570 = vpack.c.b16 %v561, %v560
        %v571 = vpack.c.b16 %v563, %v562
        %580 = vmatprep.subr.bf16.mxu0 0
        %581 = vmatpush1.bf16.msra.mxu0 %v564
        %582 = vmatprep.subr.bf16.mxu0 0
        %583 = vmatpush1.bf16.msra.mxu0 %v565
        %584 = vmatprep.subr.bf16.mxu0 0
        %585 = vmatpush1.bf16.msra.mxu0 %v566
        %586 = vmatprep.subr.bf16.mxu0 0
        %587 = vmatpush1.bf16.msra.mxu0 %v567
        %588 = vmatprep.subr.bf16.mxu0 0
        %589 = vmatpush1.bf16.msra.mxu0 %v568
        %590 = vmatprep.subr.bf16.mxu0 0
        %591 = vmatpush1.bf16.msra.mxu0 %v569
        %592 = vmatprep.subr.bf16.mxu0 0
        %593 = vmatpush1.bf16.msra.mxu0 %v570
        %594 = vmatprep.subr.bf16.mxu0 0
        %595 = vmatpush1.bf16.msra.mxu0 %v571
        %596 = vmatprep.subr.bf16.mxu0 0
        %597 = vmatpush1.bf16.msra.mxu0 0
        %598 = vmatprep.subr.bf16.mxu0 0
        %599 = vmatpush1.bf16.msra.mxu0 0
        %600 = vmatprep.subr.bf16.mxu0 0
        %601 = vmatpush1.bf16.msra.mxu0 0
        %602 = vmatprep.subr.bf16.mxu0 0
        %603 = vmatpush1.bf16.msra.mxu0 0
        %604 = vmatprep.subr.bf16.mxu0 0
        %605 = vmatpush1.bf16.msra.mxu0 0
        %606 = vmatprep.subr.bf16.mxu0 0
        %607 = vmatpush1.bf16.msra.mxu0 0
        %608 = vmatprep.subr.bf16.mxu0 0
        %609 = vmatpush1.bf16.msra.mxu0 0
        %610 = vmatprep.subr.bf16.mxu0 0
        %611 = vmatpush1.bf16.msra.mxu0 0
        %612 = vmatprep.mubr.bf16.mxu0 0
        %613 = vmatmul.mubr.bf16.gmra.mrb[0].mxu0 %v458
        %v614 = vpop.f32.mrb[0].mxu0
        %v615 = vadd.f32 %v526, %v614
        %v616 = vpop.f32.mrb[0].mxu0
        %v617 = vpop.f32.mrb[0].mxu0
        %v618 = vadd.f32 %v529, %v617
        %v619 = vpop.f32.mrb[0].mxu0
        %620 = vdwg.mxu0
        %v621 = vld [vmem:[%s6] sm:$0x1]
        %v623 = vlaneseq
        %v624 = vshrl.u32 %v623, 7
        %v625 = vsub.s32 0, %v624
        %v626 = vrot.slane %v621, %v625
        %v628 = vadd.f32 %v615, %v626
        %v629 = vadd.f32 %v618, %v626
        %v630 = vmax.f32 %v628, 0.0
        %v631 = vmax.f32 %v629, 0.0
        %s632 = sadd.s32 %s31, %s32
        %s633 = smul.u32 %s632, 16
        %s634 = sadd.s32 %s633, 16
        %p635 = scmp.gt.s32.totalorder %s634, 20
        // Predicated region
        $region57: #{tpu_custom_call.1} parent=47 // pred_check
          %p636 = pneg %p635
        $region58: #{tpu_custom_call.1} parent=47 // pred_check_branch
          %638 = sbr.rel (%p636) target = $region60
        $region59: #{tpu_custom_call.1} parent=47 // pred_region
          %v639 = vlaneseq
          %v640 = vshrl.u32 %v639, 7
          %v641 = vadd.s32 %v640, 8
          %v642 = vstv %s633
          %v643 = vadd.s32 %v642, %v640
          %v644 = vadd.s32 %v642, %v641
          %vm645 = vcmp.lt.s32.totalorder %v643, 20
          %vm646 = vcmp.lt.s32.totalorder %v644, 20
          %v647 = vsel %vm645, %v630, 0.0
          %v648 = vsel %vm646, %v631, 0.0
          %v649 = vld [vmem:[%s356] sm:$0xff]
          %v650 = vadd.f32 %v647, %v648
          %v651 = vadd.f32 %v649, %v650
          %652 = vst [vmem:[%s356] sm:$0xff] %v651
          %v653 = vld [vmem:[%s363] sm:$0xff]
          %v654 = vmul.f32 %v647, %v647
          %v655 = vmul.f32 %v648, %v648
          %v656 = vadd.f32 %v654, %v655
          %v657 = vadd.f32 %v653, %v656
          %658 = vst [vmem:[%s363] sm:$0xff] %v657
        $region60: #{tpu_custom_call.1} parent=47 // pred_fallthru
          _
        %p659 = scmp.le.s32.totalorder %s634, 20
        // Predicated region
        $region61: #{tpu_custom_call.1} parent=47 // pred_check
          %p660 = pneg %p659
        $region62: #{tpu_custom_call.1} parent=47 // pred_check_branch
          %662 = sbr.rel (%p660) target = $region64
        $region63: #{tpu_custom_call.1} parent=47 // pred_region
          %v663 = vld [vmem:[%s356] sm:$0xff]
          %v664 = vadd.f32 %v630, %v631
          %v665 = vadd.f32 %v663, %v664
          %666 = vst [vmem:[%s356] sm:$0xff] %v665
          %v667 = vld [vmem:[%s363] sm:$0xff]
          %v668 = vmul.f32 %v630, %v630
          %v669 = vmul.f32 %v631, %v631
          %v670 = vadd.f32 %v668, %v669
          %v671 = vadd.f32 %v667, %v670
          %672 = vst [vmem:[%s363] sm:$0xff] %v671
        $region64: #{tpu_custom_call.1} parent=47 // pred_fallthru
          _
        %s673 = sand.u32 %s208, 1
        %s674 = scalar_lea.sflag [#allocation4], %s673
        %s675 = sand.u32 %s208, 1
        %s676 = smul.addr %s675, 8
        %s677 = scalar_lea.vmem [#allocation5], %s676
        %s678 = sand.u32 %s234, 1
        %s679 = scalar_lea.sflag [#allocation7], %s678
        %s680 = sand.u32 %s234, 1
        %s681 = smul.addr %s680, 8
        %s682 = scalar_lea.vmem [#allocation6], %s681
        // Predicated region
        $region65: #{tpu_custom_call.1} parent=47 // pred_check
          %p683 = pneg %p218
        $region66: #{tpu_custom_call.1} parent=47 // pred_check_branch
          %685 = sbr.rel (%p683) target = $region68
        $region67: #{tpu_custom_call.1} parent=47 // pred_region
          %s687 = ssub.s32 128, 128
          %688 = vsyncadd %s674, %s687
          %s689 = smul.addr %s31, 128
          %s690 = scalar_lea.hbm %s7, %s689
          %s692 = sshll.u32 %s677, 4
          %s693 = int_to_ptr.vmem [resolvable:$true] %s692
          %695 = dma.vmem_to_hbm [thread:$0]  %s693, 128, %s690, %s674
        $region68: #{tpu_custom_call.1} parent=47 // pred_fallthru
          _
        // Predicated region
        $region69: #{tpu_custom_call.1} parent=47 // pred_check
          %p696 = pneg %p244
        $region70: #{tpu_custom_call.1} parent=47 // pred_check_branch
          %698 = sbr.rel (%p696) target = $region72
        $region71: #{tpu_custom_call.1} parent=47 // pred_region
          %s700 = ssub.s32 128, 128
          %701 = vsyncadd %s679, %s700
          %s702 = smul.addr %s31, 128
          %s703 = scalar_lea.hbm %s8, %s702
          %s705 = sshll.u32 %s682, 4
          %s706 = int_to_ptr.vmem [resolvable:$true] %s705
          %708 = dma.vmem_to_hbm [thread:$0]  %s706, 128, %s703, %s679
        $region72: #{tpu_custom_call.1} parent=47 // pred_fallthru
          _
      $region48: #{tpu_custom_call.1} parent=5 // pred_fallthru
        _
      %p709 = scmp.le.s32.totalorder 2, %s22
      // Predicated region
      $region73: #{tpu_custom_call.1} parent=5 // pred_check
        %p710 = pneg %p709
      $region74: #{tpu_custom_call.1} parent=5 // pred_check_branch
        %712 = sbr.rel (%p710) target = $region76
      $region75: #{tpu_custom_call.1} parent=5 // pred_region
        %s713 = ssub.s32 %s22, 2
        // Predicated region
        $region77: #{tpu_custom_call.1} parent=75 // pred_check
          %p714 = pneg %p224
        $region78: #{tpu_custom_call.1} parent=75 // pred_check_branch
          %716 = sbr.rel (%p714) target = $region80
        $region79: #{tpu_custom_call.1} parent=75 // pred_region
          %s717 = sand.u32 %s209, 1
          %s718 = scalar_lea.sflag [#allocation4], %s717
          %s719 = sand.u32 %s209, 1
          %s720 = smul.addr %s719, 8
          %s721 = scalar_lea.vmem [#allocation5], %s720
          %722 = dma.done %s718, 128
        $region80: #{tpu_custom_call.1} parent=75 // pred_fallthru
          _
        // Predicated region
        $region81: #{tpu_custom_call.1} parent=75 // pred_check
          %p723 = pneg %p250
        $region82: #{tpu_custom_call.1} parent=75 // pred_check_branch
          %725 = sbr.rel (%p723) target = $region84
        $region83: #{tpu_custom_call.1} parent=75 // pred_region
          %s726 = sand.u32 %s235, 1
          %s727 = scalar_lea.sflag [#allocation7], %s726
          %s728 = sand.u32 %s235, 1
          %s729 = smul.addr %s728, 8
          %s730 = scalar_lea.vmem [#allocation6], %s729
          %731 = dma.done %s727, 128
        $region84: #{tpu_custom_call.1} parent=75 // pred_fallthru
          _
      $region76: #{tpu_custom_call.1} parent=5 // pred_fallthru
        _
    $region6: #{tpu_custom_call.1} parent=1 // loop_footer
      %s26 = sadd.s32 1, %s22
    $region7: #{tpu_custom_call.1} parent=1 // loop_footer_branch
      %21 = sbr.rel target = $region3
    $region8: #{tpu_custom_call.1} parent=1 // loop_exit
      _
    %732 = vsyncpa [#allocation3], 1
    %s733 = scalar_lea.sflag [#allocation3], 1
    %734 = vsyncpa %s733, 1
    %735 = vsyncpa [#allocation4], 1
    %s736 = scalar_lea.sflag [#allocation4], 1
    %737 = vsyncpa %s736, 1
    %738 = vsyncpa [#allocation7], 1
    %s739 = scalar_lea.sflag [#allocation7], 1
    %740 = vsyncpa %s739, 1

</llo_original>
